<compile_context>
chip_gen: v6e
topology: v6e:2x2x1
jax: 0.10.0
libtpu: 0.0.40
codegen_flags: <defaults>
</compile_context>

<pallas_src>
import functools

import jax
import jax.numpy as jnp
from jax.experimental import pallas as pl
from jax.experimental.pallas import tpu as pltpu


def _round_up(x: int, m: int) -> int:
    return ((x + m - 1) // m) * m


def _cdiv(a: int, b: int) -> int:
    return -(-a // b)


# --------------------------------------------------------------------------- kernel

def lin_block_kernel(x_ref, w1_ref, b1_ref, w2_ref, b2_ref, o_ref):
    # Dropout is identity in inference mode.
    # Cast the streaming activation tile to bf16 in-kernel (no bf16 copy of x in HBM).
    x_bf16 = x_ref[...].astype(jnp.bfloat16)
    # First linear: bf16 operands, f32 accumulation on the MXU.
    h = jnp.dot(x_bf16, w1_ref[...], preferred_element_type=jnp.float32)
    h = jnp.maximum(h + b1_ref[...], 0.0)            # bias + ReLU in f32 (v5e-safe)
    # Second linear: bf16 activation operand, f32 accumulator.
    out = jnp.dot(h.astype(jnp.bfloat16), w2_ref[...],
                  preferred_element_type=jnp.float32)
    o_ref[...] = (out + b2_ref[...]).astype(o_ref.dtype)


# ---------------------------------------------------------------- one-time weight prep

def prepare_lin_block_params(w1, b1, w2, b2):
    """Model-load-time preparation: pad lane dims to 128 and cast weights to bf16.

    Called ONCE; the returned arrays are passed to every forward call, so the per-call
    path never re-pads or re-casts the weights (steady-state = one bf16 weight read).
    Zero padding is numerically exact for this MLP (relu(0 + 0) = 0, 0-rows of w2
    contribute nothing).
    """
    in_lin, inbetw = w1.shape
    ncls = w2.shape[1]
    inbetw_p = _round_up(inbetw, 128)
    ncls_p = _round_up(ncls, 128)

    w1_p = jnp.zeros((in_lin, inbetw_p), jnp.bfloat16).at[:, :inbetw].set(
        w1.astype(jnp.bfloat16))
    b1_p = jnp.zeros((1, inbetw_p), jnp.float32).at[:, :inbetw].set(
        jnp.asarray(b1, jnp.float32).reshape(1, -1))
    w2_p = jnp.zeros((inbetw_p, ncls_p), jnp.bfloat16).at[:inbetw, :ncls].set(
        w2.astype(jnp.bfloat16))
    b2_p = jnp.zeros((1, ncls_p), jnp.float32).at[:, :ncls].set(
        jnp.asarray(b2, jnp.float32).reshape(1, -1))
    return w1_p, b1_p, w2_p, b2_p


# --------------------------------------------------------------------- tiling helpers

def _vmem_bytes(tb, in_lin, inbetw_p, ncls_p):
    # Resident (single-buffered) weights/biases.
    weights = (in_lin * inbetw_p * 2 + inbetw_p * 4
               + inbetw_p * ncls_p * 2 + ncls_p * 4)
    # Pipelined, double-buffered x (f32) and out (f32) tiles.
    streams = 2 * tb * in_lin * 4 + 2 * tb * ncls_p * 4
    # In-kernel temporaries: bf16 copy of the x tile + f32/bf16 h tile (upper bound).
    temps = tb * in_lin * 2 + tb * inbetw_p * 6
    return weights + streams + temps


def _choose_batch_tile(B, max_tb, in_lin, inbetw_p, ncls_p, vmem_budget_bytes):
    """Pick (tb, n_steps): bounded padding waste, >=2 steps for v7x's 2 TCs when
    possible, and a working set that fits the per-generation VMEM budget."""
    B8 = _round_up(B, 8)
    n_steps = _cdiv(B8, max_tb)
    if n_steps < 2 and B8 >= 16:
        n_steps = 2                       # give the 2nd TensorCore (v7x) work
    tb = _round_up(_cdiv(B8, n_steps), 8)
    # Shrink the tile (adding grid steps) until the working set fits the VMEM budget.
    while tb > 8 and _vmem_bytes(tb, in_lin, inbetw_p, ncls_p) > vmem_budget_bytes:
        tb = max(8, _round_up(_cdiv(tb, 2), 8))
    n_steps = _cdiv(B8, tb)
    return tb, n_steps


# --------------------------------------------------------------------------- forward

@functools.partial(jax.jit,
                   static_argnames=("num_classes", "max_tb", "vmem_budget_bytes"))
def transformer_lin_forward(x, w1_p, b1_p, w2_p, b2_p, *, num_classes,
                            max_tb: int = 256,
                            vmem_budget_bytes: int = 40 * 1024 * 1024):
    """Fused LinBlock forward: relu(x @ w1 + b1) @ w2 + b2 (inference semantics).

    Expects pre-padded bf16 weights / f32 biases from prepare_lin_block_params().
    """
    B, in_lin = x.shape
    inbetw_p = w1_p.shape[1]
    ncls_p = w2_p.shape[1]

    tb, n_steps = _choose_batch_tile(B, max_tb, in_lin, inbetw_p, ncls_p,
                                     vmem_budget_bytes)
    b_p = tb * n_steps

    # Pad batch rows only when needed; x stays f32 (cast to bf16 happens in-kernel),
    # so no padded bf16 copy of x ever round-trips through HBM.
    x_p = x if b_p == B else jnp.pad(x, ((0, b_p - B), (0, 0)))

    vmem_bytes = _vmem_bytes(tb, in_lin, inbetw_p, ncls_p)
    vmem_limit = int(min(max(2 * vmem_bytes + (8 << 20), 32 << 20), 64 << 20))

    weight_bytes = (in_lin * inbetw_p * 2 + inbetw_p * 4
                    + inbetw_p * ncls_p * 2 + ncls_p * 4)
    cost = pl.CostEstimate(
        flops=2 * b_p * (in_lin * inbetw_p + inbetw_p * ncls_p),
        transcendentals=0,
        bytes_accessed=b_p * in_lin * 4 + weight_bytes + b_p * ncls_p * 4,
    )

    out_p = pl.pallas_call(
        lin_block_kernel,
        out_shape=jax.ShapeDtypeStruct((b_p, ncls_p), jnp.float32),
        grid=(n_steps,),
        in_specs=[
            # Activations stream over the batch grid axis (double-buffered pipeline).
            pl.BlockSpec((tb, in_lin), lambda i: (i, 0)),
            # Weights / biases: whole-array, VMEM-resident, single-buffered
            # (DMA'd once per call, not run through the double-buffered pipeline).
            pl.BlockSpec(memory_space=pltpu.MemorySpace.VMEM),
            pl.BlockSpec(memory_space=pltpu.MemorySpace.VMEM),
            pl.BlockSpec(memory_space=pltpu.MemorySpace.VMEM),
            pl.BlockSpec(memory_space=pltpu.MemorySpace.VMEM),
        ],
        out_specs=pl.BlockSpec((tb, ncls_p), lambda i: (i, 0)),
        compiler_params=pltpu.CompilerParams(
            # Batch tiles are independent -> shardable across v7x's 2 TensorCores.
            dimension_semantics=("parallel",),
            vmem_limit_bytes=vmem_limit,
        ),
        cost_estimate=cost,
    )(x_p, w1_p, b1_p, w2_p, b2_p)

    # Strip batch + lane padding.
    return out_p[:B, :num_classes]


# ------------------------------------------------------------------------------ demo

def init_linear_params(key, fan_in, fan_out, dtype=jnp.float32):
    """Deterministic init mimicking torch.nn.Linear (uniform +/- 1/sqrt(fan_in))."""
    kw, kb = jax.random.split(key)
    bound = 1.0 / jnp.sqrt(fan_in)
    # stored as (in_features, out_features) so the kernel does x @ W
    w = jax.random.uniform(kw, (fan_in, fan_out), dtype, -bound, bound)
    b = jax.random.uniform(kb, (1, fan_out), dtype, -bound, bound)
    return w, b


if __name__ == "__main__":
    # Small shapes consistent with the module's forward:
    #   batch=8, in_lin_size=256, inbetw_lin_size=128, num_classes=16
    batch = 8
    in_lin_size = 256
    inbetw_lin_size = 128
    num_classes = 16

    key = jax.random.PRNGKey(0)
    kx, k1, k2 = jax.random.split(key, 3)

    # x plays the role of transformer_out (the pretrained transformer's output features).
    x = jax.random.normal(kx, (batch, in_lin_size), jnp.float32)
    w1, b1 = init_linear_params(k1, in_lin_size, inbetw_lin_size)
    w2, b2 = init_linear_params(k2, inbetw_lin_size, num_classes)

    # One-time (model-load-time) weight preparation: pad + bf16 cast, NOT per call.
    w1_p, b1_p, w2_p, b2_p = prepare_lin_block_params(w1, b1, w2, b2)

    out = transformer_lin_forward(x, w1_p, b1_p, w2_p, b2_p,
                                  num_classes=num_classes)
    out = jax.block_until_ready(out)
    assert out.shape == (batch, num_classes)

    # Reference with the same bf16 operand rounding + f32 accumulation.
    xb = x.astype(jnp.bfloat16).astype(jnp.float32)
    w1b = w1.astype(jnp.bfloat16).astype(jnp.float32)
    w2b = w2.astype(jnp.bfloat16).astype(jnp.float32)
    h_ref = jnp.maximum(xb @ w1b + b1, 0.0)
    ref = h_ref.astype(jnp.bfloat16).astype(jnp.float32) @ w2b + b2
    assert jnp.allclose(out, ref, atol=1e-2, rtol=1e-2), \
        f"max abs err {jnp.max(jnp.abs(out - ref))}"

    # Loose sanity check against the full-f32 math as well.
    ref_f32 = jnp.maximum(x @ w1 + b1, 0.0) @ w2 + b2
    assert jnp.allclose(out, ref_f32, atol=2e-1, rtol=2e-1)

    print("KERNEL_OK")
</pallas_src>

<mosaic_0001>
module attributes {stable_mosaic.version = 11 : i64} {
  func.func @lin_block_kernel(%arg0: i32, %arg1: memref<8x256xf32, #tpu.memory_space<vmem>>, %arg2: memref<256x128xbf16, #tpu.memory_space<vmem>>, %arg3: memref<1x128xf32, #tpu.memory_space<vmem>>, %arg4: memref<128x128xbf16, #tpu.memory_space<vmem>>, %arg5: memref<1x128xf32, #tpu.memory_space<vmem>>, %arg6: memref<8x128xf32, #tpu.memory_space<vmem>>) attributes {dimension_semantics = [#tpu.dimension_semantics<parallel>], iteration_bounds = array<i64: 1>, scalar_prefetch = 0 : i64, scratch_operands = 0 : i64, tpu.core_type = #tpu.core_type<tc>, window_params = [{transform_indices = @transform_0, window_bounds = array<i64: 8, 256>}, {pipeline_mode = #tpu.pipeline_mode<synchronous>, transform_indices = @transform_1, window_bounds = array<i64: 256, 128>}, {pipeline_mode = #tpu.pipeline_mode<synchronous>, transform_indices = @transform_2, window_bounds = array<i64: 1, 128>}, {pipeline_mode = #tpu.pipeline_mode<synchronous>, transform_indices = @transform_3, window_bounds = array<i64: 128, 128>}, {pipeline_mode = #tpu.pipeline_mode<synchronous>, transform_indices = @transform_4, window_bounds = array<i64: 1, 128>}, {transform_indices = @transform_5, window_bounds = array<i64: 8, 128>}]} {
    %c0 = arith.constant 0 : index
    %c0_0 = arith.constant 0 : index
    %0 = vector.load %arg1[%c0, %c0_0] : memref<8x256xf32, #tpu.memory_space<vmem>>, vector<8x256xf32>
    %1 = arith.truncf %0 : vector<8x256xf32> to vector<8x256xbf16>
    %c0_1 = arith.constant 0 : index
    %c0_2 = arith.constant 0 : index
    %2 = vector.load %arg2[%c0_1, %c0_2] : memref<256x128xbf16, #tpu.memory_space<vmem>>, vector<256x128xbf16>
    %cst = arith.constant dense<0.000000e+00> : vector<8x128xf32>
    %3 = tpu.matmul %1, %2, %cst {dimension_numbers = #tpu.dot_dimension_numbers<[1], [0], [0], [1], [0, 0, 1, 1], [], []>} : vector<8x256xbf16>, vector<256x128xbf16>, vector<8x128xf32> -> vector<8x128xf32>
    %c0_3 = arith.constant 0 : index
    %c0_4 = arith.constant 0 : index
    %4 = vector.load %arg3[%c0_3, %c0_4] : memref<1x128xf32, #tpu.memory_space<vmem>>, vector<1x128xf32>
    %5 = vector.broadcast %4 : vector<1x128xf32> to vector<8x128xf32>
    %6 = arith.addf %3, %5 : vector<8x128xf32>
    %cst_5 = arith.constant 0.000000e+00 : f32
    %7 = vector.broadcast %cst_5 : f32 to vector<8x128xf32>
    %8 = arith.maximumf %6, %7 : vector<8x128xf32>
    %9 = arith.truncf %8 : vector<8x128xf32> to vector<8x128xbf16>
    %c0_6 = arith.constant 0 : index
    %c0_7 = arith.constant 0 : index
    %10 = vector.load %arg4[%c0_6, %c0_7] : memref<128x128xbf16, #tpu.memory_space<vmem>>, vector<128x128xbf16>
    %cst_8 = arith.constant dense<0.000000e+00> : vector<8x128xf32>
    %11 = tpu.matmul %9, %10, %cst_8 {dimension_numbers = #tpu.dot_dimension_numbers<[1], [0], [0], [1], [0, 0, 1, 1], [], []>} : vector<8x128xbf16>, vector<128x128xbf16>, vector<8x128xf32> -> vector<8x128xf32>
    %c0_9 = arith.constant 0 : index
    %c0_10 = arith.constant 0 : index
    %12 = vector.load %arg5[%c0_9, %c0_10] : memref<1x128xf32, #tpu.memory_space<vmem>>, vector<1x128xf32>
    %13 = vector.broadcast %12 : vector<1x128xf32> to vector<8x128xf32>
    %14 = arith.addf %11, %13 : vector<8x128xf32>
    %c0_11 = arith.constant 0 : index
    %c0_12 = arith.constant 0 : index
    %15 = vector.load %arg6[%c0_11, %c0_12] : memref<8x128xf32, #tpu.memory_space<vmem>>, vector<8x128xf32>
    tpu.vector_store %arg6[%c0_11, %c0_12], %14 {strides = array<i32>} : memref<8x128xf32, #tpu.memory_space<vmem>>, vector<8x128xf32>,
    return
  }
  func.func @transform_0(%arg0: i32) -> (i32, i32) {
    %c0_i32 = arith.constant 0 : i32
    %c0_i32_0 = arith.constant 0 : i32
    return %arg0, %c0_i32 : i32, i32
  }
  func.func @transform_1(%arg0: i32) -> (i32, i32) {
    %c0_i32 = arith.constant 0 : i32
    %c0_i32_0 = arith.constant 0 : i32
    %c0_i32_1 = arith.constant 0 : i32
    return %c0_i32, %c0_i32_0 : i32, i32
  }
  func.func @transform_2(%arg0: i32) -> (i32, i32) {
    %c0_i32 = arith.constant 0 : i32
    %c0_i32_0 = arith.constant 0 : i32
    %c0_i32_1 = arith.constant 0 : i32
    return %c0_i32, %c0_i32_0 : i32, i32
  }
  func.func @transform_3(%arg0: i32) -> (i32, i32) {
    %c0_i32 = arith.constant 0 : i32
    %c0_i32_0 = arith.constant 0 : i32
    %c0_i32_1 = arith.constant 0 : i32
    return %c0_i32, %c0_i32_0 : i32, i32
  }
  func.func @transform_4(%arg0: i32) -> (i32, i32) {
    %c0_i32 = arith.constant 0 : i32
    %c0_i32_0 = arith.constant 0 : i32
    %c0_i32_1 = arith.constant 0 : i32
    return %c0_i32, %c0_i32_0 : i32, i32
  }
  func.func @transform_5(%arg0: i32) -> (i32, i32) {
    %c0_i32 = arith.constant 0 : i32
    %c0_i32_0 = arith.constant 0 : i32
    return %arg0, %c0_i32 : i32, i32
  }
}

</mosaic_0001>

<llo_original>
// kernel: transformer_lin_forward.1
$region0: #{transformer_lin_forward.1}
  #allocation0 [shape = 'u32[]', space=smem, size = 0x4, offset = 0x4, fixed_abs, tag = 'smem constant byte address 0x4 - core index']
  #allocation1 [shape = 'u32[144,128]{1,0:T(1,128)}', space=vmem, size = 0x12000, scoped, tag = 'internal scratch']
  %s0 = inlined_call_operand.hbm [shape: f32[8,256], index: 0, kind: input, shape index: {}]
  %s1 = inlined_call_operand.hbm [shape: bf16[256,128], index: 1, kind: input, shape index: {}]
  %s2 = inlined_call_operand.vmem [shape: f32[1,128], index: 2, kind: input, shape index: {}]
  %s3 = inlined_call_operand.hbm [shape: bf16[128,128], index: 3, kind: input, shape index: {}]
  %s4 = inlined_call_operand.vmem [shape: f32[1,128], index: 4, kind: input, shape index: {}]
  %s5 = inlined_call_operand.hbm [shape: f32[8,128], index: 5, kind: output, shape index: {}]
  %s6 = sld [smem:[#allocation0]]
  $region42: #{transformer_lin_forward.1} parent=0
    _
  %s8 = ssub.s32 1, %s6
  %s9 = scalar_select 0, %s8, %s6
  $region1: #{transformer_lin_forward.1} parent=0
    #allocation2 [shape = 'u8[8192]{0}', space=vmem, size = 0x2000, scoped, tag = 'input window, operand 0, single buffered']
    #allocation3 [shape = 's32[1]{0}', space=sflag, size = 0x4, scoped, tag = 'scoped memory for transformer_lin_forward.1']
    #allocation4 [shape = 's32[1]{0}', space=sflag, size = 0x4, scoped, tag = 'scoped memory for transformer_lin_forward.1']
    #allocation5 [shape = 'u8[65536]{0}', space=vmem, size = 0x10000, scoped, tag = 'input window, operand 1, single buffered']
    #allocation6 [shape = 's32[1]{0}', space=sflag, size = 0x4, scoped, tag = 'scoped memory for transformer_lin_forward.1']
    #allocation7 [shape = 'u8[32768]{0}', space=vmem, size = 0x8000, scoped, tag = 'input window, operand 3, single buffered']
    #allocation8 [shape = 'u8[4096]{0}', space=vmem, size = 0x1000, scoped, tag = 'output window, operand 0, single buffered']
    %10 = vsyncpa [#allocation3], 0
    %11 = vsyncpa [#allocation6], 0
    %12 = vsyncpa [#allocation4], 0
    // Predicated region
    $region2: #{transformer_lin_forward.1} parent=1 // pred_check
      _
    $region3: #{transformer_lin_forward.1} parent=1 // pred_check_branch
      %14 = sbr.rel (0) target = $region5
    $region4: #{transformer_lin_forward.1} parent=1 // pred_region
      %s16 = ssub.s32 256, 256
      %17 = vsyncadd [#allocation3], %s16
      %s19 = sshll.u32 [#allocation2], 4
      %s20 = int_to_ptr.vmem [resolvable:$true] %s19
      %22 = dma.hbm_to_vmem [thread:$0]  %s0, 256, %s20, [#allocation3]
    $region5: #{transformer_lin_forward.1} parent=1 // pred_fallthru
      _
    // Predicated region
    $region6: #{transformer_lin_forward.1} parent=1 // pred_check
      _
    $region7: #{transformer_lin_forward.1} parent=1 // pred_check_branch
      %24 = sbr.rel (0) target = $region9
    $region8: #{transformer_lin_forward.1} parent=1 // pred_region
      %s26 = ssub.s32 2048, 2048
      %27 = vsyncadd [#allocation6], %s26
      %s28 = sshll.u32 [#allocation5], 4
      %s29 = int_to_ptr.vmem [resolvable:$true] %s28
      %34 = dma.hbm_to_vmem [thread:$0]  %s1, 2048, %s29, [#allocation6], 64, 64, 4
    $region9: #{transformer_lin_forward.1} parent=1 // pred_fallthru
      _
    // Predicated region
    $region10: #{transformer_lin_forward.1} parent=1 // pred_check
      _
    $region11: #{transformer_lin_forward.1} parent=1 // pred_check_branch
      %36 = sbr.rel (0) target = $region13
    $region12: #{transformer_lin_forward.1} parent=1 // pred_region
      _
    $region13: #{transformer_lin_forward.1} parent=1 // pred_fallthru
      _
    // Predicated region
    $region14: #{transformer_lin_forward.1} parent=1 // pred_check
      _
    $region15: #{transformer_lin_forward.1} parent=1 // pred_check_branch
      %38 = sbr.rel (0) target = $region17
    $region16: #{transformer_lin_forward.1} parent=1 // pred_region
      %s40 = ssub.s32 1024, 1024
      %41 = vsyncadd [#allocation6], %s40
      %s42 = sshll.u32 [#allocation7], 4
      %s43 = int_to_ptr.vmem [resolvable:$true] %s42
      %48 = dma.hbm_to_vmem [thread:$0]  %s3, 1024, %s43, [#allocation6], 64, 64, 4
    $region17: #{transformer_lin_forward.1} parent=1 // pred_fallthru
      _
    // Predicated region
    $region18: #{transformer_lin_forward.1} parent=1 // pred_check
      _
    $region19: #{transformer_lin_forward.1} parent=1 // pred_check_branch
      %50 = sbr.rel (0) target = $region21
    $region20: #{transformer_lin_forward.1} parent=1 // pred_region
      _
    $region21: #{transformer_lin_forward.1} parent=1 // pred_fallthru
      _
    // Predicated region
    $region22: #{transformer_lin_forward.1} parent=1 // pred_check
      _
    $region23: #{transformer_lin_forward.1} parent=1 // pred_check_branch
      %52 = sbr.rel (0) target = $region25
    $region24: #{transformer_lin_forward.1} parent=1 // pred_region
      %53 = dma.done [#allocation3], 256
    $region25: #{transformer_lin_forward.1} parent=1 // pred_fallthru
      _
    // Predicated region
    $region26: #{transformer_lin_forward.1} parent=1 // pred_check
      _
    $region27: #{transformer_lin_forward.1} parent=1 // pred_check_branch
      %55 = sbr.rel (0) target = $region29
    $region28: #{transformer_lin_forward.1} parent=1 // pred_region
      %56 = dma.done [#allocation6], 2048
    $region29: #{transformer_lin_forward.1} parent=1 // pred_fallthru
      _
    // Predicated region
    $region30: #{transformer_lin_forward.1} parent=1 // pred_check
      _
    $region31: #{transformer_lin_forward.1} parent=1 // pred_check_branch
      %58 = sbr.rel (0) target = $region33
    $region32: #{transformer_lin_forward.1} parent=1 // pred_region
      %59 = dma.done [#allocation6], 1024
    $region33: #{transformer_lin_forward.1} parent=1 // pred_fallthru
      _
    %v61 = vld [vmem:[#allocation2] sm:$0xff]
    %v62 = vld [vmem:[#allocation2 + $0x8] sm:$0xff]
    %v63 = vpack.c.bf16 %v61, %v61
    %v64 = vpack.c.bf16 %v62, %v62
    %v65 = vld [vmem:[#allocation5] sm:$0xf]
    %v66 = vld [vmem:[#allocation5 + $0x4] sm:$0xf]
    %v67 = vld [vmem:[#allocation5 + $0x8] sm:$0xf]
    %v68 = vld [vmem:[#allocation5 + $0xc] sm:$0xf]
    %v69 = vld [vmem:[#allocation5 + $0x10] sm:$0xf]
    %v70 = vld [vmem:[#allocation5 + $0x14] sm:$0xf]
    %v71 = vld [vmem:[#allocation5 + $0x18] sm:$0xf]
    %v72 = vld [vmem:[#allocation5 + $0x1c] sm:$0xf]
    %v73 = vld [vmem:[#allocation5 + $0x20] sm:$0xf]
    %v74 = vld [vmem:[#allocation5 + $0x24] sm:$0xf]
    %v75 = vld [vmem:[#allocation5 + $0x28] sm:$0xf]
    %v76 = vld [vmem:[#allocation5 + $0x2c] sm:$0xf]
    %v77 = vld [vmem:[#allocation5 + $0x30] sm:$0xf]
    %v78 = vld [vmem:[#allocation5 + $0x34] sm:$0xf]
    %v79 = vld [vmem:[#allocation5 + $0x38] sm:$0xf]
    %v80 = vld [vmem:[#allocation5 + $0x3c] sm:$0xf]
    %v81 = vld [vmem:[#allocation5 + $0x40] sm:$0xf]
    %v82 = vld [vmem:[#allocation5 + $0x44] sm:$0xf]
    %v83 = vld [vmem:[#allocation5 + $0x48] sm:$0xf]
    %v84 = vld [vmem:[#allocation5 + $0x4c] sm:$0xf]
    %v85 = vld [vmem:[#allocation5 + $0x50] sm:$0xf]
    %v86 = vld [vmem:[#allocation5 + $0x54] sm:$0xf]
    %v87 = vld [vmem:[#allocation5 + $0x58] sm:$0xf]
    %v88 = vld [vmem:[#allocation5 + $0x5c] sm:$0xf]
    %v89 = vld [vmem:[#allocation5 + $0x60] sm:$0xf]
    %v90 = vld [vmem:[#allocation5 + $0x64] sm:$0xf]
    %v91 = vld [vmem:[#allocation5 + $0x68] sm:$0xf]
    %v92 = vld [vmem:[#allocation5 + $0x6c] sm:$0xf]
    %v93 = vld [vmem:[#allocation5 + $0x70] sm:$0xf]
    %v94 = vld [vmem:[#allocation5 + $0x74] sm:$0xf]
    %v95 = vld [vmem:[#allocation5 + $0x78] sm:$0xf]
    %v96 = vld [vmem:[#allocation5 + $0x7c] sm:$0xf]
    %v97 = vld [vmem:[%s2] sm:$0x1]
    %v99 = vlaneseq
    %v100 = vshrl.u32 %v99, 7
    %v101 = vsub.s32 0, %v100
    %v102 = vrot.slane %v97, %v101
    %v136 = vunpack.c.l.b16 %v65
    %v137 = vunpack.c.l.b16 %v66
    %v138 = vunpack.c.l.b16 %v67
    %v139 = vunpack.c.l.b16 %v68
    %v140 = vunpack.c.l.b16 %v69
    %v141 = vunpack.c.l.b16 %v70
    %v142 = vunpack.c.l.b16 %v71
    %v143 = vunpack.c.l.b16 %v72
    %v144 = vunpack.c.l.b16 %v73
    %v145 = vunpack.c.l.b16 %v74
    %v146 = vunpack.c.l.b16 %v75
    %v147 = vunpack.c.l.b16 %v76
    %v148 = vunpack.c.l.b16 %v77
    %v149 = vunpack.c.l.b16 %v78
    %v150 = vunpack.c.l.b16 %v79
    %v151 = vunpack.c.l.b16 %v80
    %v152 = vunpack.c.l.b16 %v81
    %v153 = vunpack.c.l.b16 %v82
    %v154 = vunpack.c.l.b16 %v83
    %v155 = vunpack.c.l.b16 %v84
    %v156 = vunpack.c.l.b16 %v85
    %v157 = vunpack.c.l.b16 %v86
    %v158 = vunpack.c.l.b16 %v87
    %v159 = vunpack.c.l.b16 %v88
    %v160 = vunpack.c.l.b16 %v89
    %v161 = vunpack.c.l.b16 %v90
    %v162 = vunpack.c.l.b16 %v91
    %v163 = vunpack.c.l.b16 %v92
    %v164 = vunpack.c.l.b16 %v93
    %v165 = vunpack.c.l.b16 %v94
    %v166 = vunpack.c.l.b16 %v95
    %v167 = vunpack.c.l.b16 %v96
    %v168 = vpack.c.b16 %v137, %v136
    %v169 = vpack.c.b16 %v139, %v138
    %v170 = vpack.c.b16 %v141, %v140
    %v171 = vpack.c.b16 %v143, %v142
    %v172 = vpack.c.b16 %v145, %v144
    %v173 = vpack.c.b16 %v147, %v146
    %v174 = vpack.c.b16 %v149, %v148
    %v175 = vpack.c.b16 %v151, %v150
    %v176 = vpack.c.b16 %v153, %v152
    %v177 = vpack.c.b16 %v155, %v154
    %v178 = vpack.c.b16 %v157, %v156
    %v179 = vpack.c.b16 %v159, %v158
    %v180 = vpack.c.b16 %v161, %v160
    %v181 = vpack.c.b16 %v163, %v162
    %v182 = vpack.c.b16 %v165, %v164
    %v183 = vpack.c.b16 %v167, %v166
    %200 = vmatprep.subr.bf16.mxu0 0
    %201 = vmatpush1.bf16.msra.mxu0 %v175
    %202 = vmatprep.subr.bf16.mxu0 0
    %203 = vmatpush1.bf16.msra.mxu0 %v174
    %204 = vmatprep.subr.bf16.mxu0 0
    %205 = vmatpush1.bf16.msra.mxu0 %v173
    %206 = vmatprep.subr.bf16.mxu0 0
    %207 = vmatpush1.bf16.msra.mxu0 %v172
    %208 = vmatprep.subr.bf16.mxu0 0
    %209 = vmatpush1.bf16.msra.mxu0 %v171
    %210 = vmatprep.subr.bf16.mxu0 0
    %211 = vmatpush1.bf16.msra.mxu0 %v170
    %212 = vmatprep.subr.bf16.mxu0 0
    %213 = vmatpush1.bf16.msra.mxu0 %v169
    %214 = vmatprep.subr.bf16.mxu0 0
    %215 = vmatpush1.bf16.msra.mxu0 %v168
    %216 = vmatprep.subr.bf16.mxu0 0
    %217 = vmatpush2.bf16.msra.mxu0 %v183
    %218 = vmatprep.subr.bf16.mxu0 0
    %219 = vmatpush2.bf16.msra.mxu0 %v182
    %220 = vmatprep.subr.bf16.mxu0 0
    %221 = vmatpush2.bf16.msra.mxu0 %v181
    %222 = vmatprep.subr.bf16.mxu0 0
    %223 = vmatpush2.bf16.msra.mxu0 %v180
    %224 = vmatprep.subr.bf16.mxu0 0
    %225 = vmatpush2.bf16.msra.mxu0 %v179
    %226 = vmatprep.subr.bf16.mxu0 0
    %227 = vmatpush2.bf16.msra.mxu0 %v178
    %228 = vmatprep.subr.bf16.mxu0 0
    %229 = vmatpush2.bf16.msra.mxu0 %v177
    %230 = vmatprep.subr.bf16.mxu0 0
    %231 = vmatpush2.bf16.msra.mxu0 %v176
    %232 = vmatprep.mubr.bf16.mxu0 %v64
    %233 = vmatmul.mubr.bf16.gmra.mxu0 %v63
    %v234 = vpop.f32.mrf.mxu0
    %v235 = vadd.f32 %v102, %v234
    %v236 = vpop.f32.mrf.mxu0
    %v237 = vpop.f32.mrf.mxu0
    %v238 = vpop.f32.mrf.mxu0
    %239 = vdwg.mxu0
    %v240 = vmax.f32 %v235, 0.0
    %v241 = vpack.c.bf16 %v240, %v240
    %v242 = vld [vmem:[#allocation7] sm:$0xf]
    %v243 = vld [vmem:[#allocation7 + $0x4] sm:$0xf]
    %v244 = vld [vmem:[#allocation7 + $0x8] sm:$0xf]
    %v245 = vld [vmem:[#allocation7 + $0xc] sm:$0xf]
    %v246 = vld [vmem:[#allocation7 + $0x10] sm:$0xf]
    %v247 = vld [vmem:[#allocation7 + $0x14] sm:$0xf]
    %v248 = vld [vmem:[#allocation7 + $0x18] sm:$0xf]
    %v249 = vld [vmem:[#allocation7 + $0x1c] sm:$0xf]
    %v250 = vld [vmem:[#allocation7 + $0x20] sm:$0xf]
    %v251 = vld [vmem:[#allocation7 + $0x24] sm:$0xf]
    %v252 = vld [vmem:[#allocation7 + $0x28] sm:$0xf]
    %v253 = vld [vmem:[#allocation7 + $0x2c] sm:$0xf]
    %v254 = vld [vmem:[#allocation7 + $0x30] sm:$0xf]
    %v255 = vld [vmem:[#allocation7 + $0x34] sm:$0xf]
    %v256 = vld [vmem:[#allocation7 + $0x38] sm:$0xf]
    %v257 = vld [vmem:[#allocation7 + $0x3c] sm:$0xf]
    %v258 = vld [vmem:[%s4] sm:$0x1]
    %v260 = vlaneseq
    %v261 = vshrl.u32 %v260, 7
    %v262 = vsub.s32 0, %v261
    %v263 = vrot.slane %v258, %v262
    %v281 = vunpack.c.l.b16 %v242
    %v282 = vunpack.c.l.b16 %v243
    %v283 = vunpack.c.l.b16 %v244
    %v284 = vunpack.c.l.b16 %v245
    %v285 = vunpack.c.l.b16 %v246
    %v286 = vunpack.c.l.b16 %v247
    %v287 = vunpack.c.l.b16 %v248
    %v288 = vunpack.c.l.b16 %v249
    %v289 = vunpack.c.l.b16 %v250
    %v290 = vunpack.c.l.b16 %v251
    %v291 = vunpack.c.l.b16 %v252
    %v292 = vunpack.c.l.b16 %v253
    %v293 = vunpack.c.l.b16 %v254
    %v294 = vunpack.c.l.b16 %v255
    %v295 = vunpack.c.l.b16 %v256
    %v296 = vunpack.c.l.b16 %v257
    %v297 = vpack.c.b16 %v282, %v281
    %v298 = vpack.c.b16 %v284, %v283
    %v299 = vpack.c.b16 %v286, %v285
    %v300 = vpack.c.b16 %v288, %v287
    %v301 = vpack.c.b16 %v290, %v289
    %v302 = vpack.c.b16 %v292, %v291
    %v303 = vpack.c.b16 %v294, %v293
    %v304 = vpack.c.b16 %v296, %v295
    %313 = vmatprep.subr.bf16.mxu0 0
    %314 = vmatpush1.bf16.msra.mxu0 %v304
    %315 = vmatprep.subr.bf16.mxu0 0
    %316 = vmatpush1.bf16.msra.mxu0 %v303
    %317 = vmatprep.subr.bf16.mxu0 0
    %318 = vmatpush1.bf16.msra.mxu0 %v302
    %319 = vmatprep.subr.bf16.mxu0 0
    %320 = vmatpush1.bf16.msra.mxu0 %v301
    %321 = vmatprep.subr.bf16.mxu0 0
    %322 = vmatpush1.bf16.msra.mxu0 %v300
    %323 = vmatprep.subr.bf16.mxu0 0
    %324 = vmatpush1.bf16.msra.mxu0 %v299
    %325 = vmatprep.subr.bf16.mxu0 0
    %326 = vmatpush1.bf16.msra.mxu0 %v298
    %327 = vmatprep.subr.bf16.mxu0 0
    %328 = vmatpush1.bf16.msra.mxu0 %v297
    %329 = vmatprep.subr.bf16.mxu0 0
    %330 = vmatpush2.bf16.msra.mxu0 0
    %331 = vmatprep.subr.bf16.mxu0 0
    %332 = vmatpush2.bf16.msra.mxu0 0
    %333 = vmatprep.subr.bf16.mxu0 0
    %334 = vmatpush2.bf16.msra.mxu0 0
    %335 = vmatprep.subr.bf16.mxu0 0
    %336 = vmatpush2.bf16.msra.mxu0 0
    %337 = vmatprep.subr.bf16.mxu0 0
    %338 = vmatpush2.bf16.msra.mxu0 0
    %339 = vmatprep.subr.bf16.mxu0 0
    %340 = vmatpush2.bf16.msra.mxu0 0
    %341 = vmatprep.subr.bf16.mxu0 0
    %342 = vmatpush2.bf16.msra.mxu0 0
    %343 = vmatprep.subr.bf16.mxu0 0
    %344 = vmatpush2.bf16.msra.mxu0 0
    %345 = vmatprep.mubr.bf16.mxu0 0
    %346 = vmatmul.mubr.bf16.gmra.mxu0 %v241
    %v347 = vpop.f32.mrf.mxu0
    %v348 = vadd.f32 %v263, %v347
    %v349 = vpop.f32.mrf.mxu0
    %v350 = vpop.f32.mrf.mxu0
    %v351 = vpop.f32.mrf.mxu0
    %352 = vdwg.mxu0
    %353 = vst [vmem:[#allocation8] sm:$0xff] %v348
    // Predicated region
    $region34: #{transformer_lin_forward.1} parent=1 // pred_check
      _
    $region35: #{transformer_lin_forward.1} parent=1 // pred_check_branch
      %355 = sbr.rel (0) target = $region37
    $region36: #{transformer_lin_forward.1} parent=1 // pred_region
      %s357 = ssub.s32 128, 128
      %358 = vsyncadd [#allocation4], %s357
      %s360 = sshll.u32 [#allocation8], 4
      %s361 = int_to_ptr.vmem [resolvable:$true] %s360
      %363 = dma.vmem_to_hbm [thread:$0]  %s361, 128, %s5, [#allocation4]
    $region37: #{transformer_lin_forward.1} parent=1 // pred_fallthru
      _
    // Predicated region
    $region38: #{transformer_lin_forward.1} parent=1 // pred_check
      _
    $region39: #{transformer_lin_forward.1} parent=1 // pred_check_branch
      %365 = sbr.rel (0) target = $region41
    $region40: #{transformer_lin_forward.1} parent=1 // pred_region
      %366 = dma.done [#allocation4], 128
    $region41: #{transformer_lin_forward.1} parent=1 // pred_fallthru
      _
    %367 = vsyncpa [#allocation3], 1
    %368 = vsyncpa [#allocation6], 1
    %369 = vsyncpa [#allocation4], 1

</llo_original>
